<compile_context>
chip_gen: v5e
topology: v5e:2x2
jax: 0.10.0
libtpu: 0.0.40
codegen_flags: <defaults>
</compile_context>

<pallas_src>
import functools

import jax
import jax.numpy as jnp
from jax.experimental import pallas as pl
from jax.experimental.pallas import tpu as pltpu


def _round_up(x: int, m: int) -> int:
    return ((x + m - 1) // m) * m


def _fused_mlp_kernel(x_ref, *refs, num_layers: int):
    """refs = (w0, b0, w1, b1, ..., w_{L-1}, b_{L-1}, o_ref).

    Computes relu after every layer except the last, entirely in
    vregs / f32; only the final result is stored.
    """
    o_ref = refs[-1]
    wb = refs[:-1]

    y = x_ref[...].astype(jnp.float32)
    for i in range(num_layers):
        w = wb[2 * i][...]
        b = wb[2 * i + 1][...]
        y = jnp.dot(y, w, preferred_element_type=jnp.float32) + b
        if i < num_layers - 1:
            y = jnp.maximum(y, 0.0)
    o_ref[...] = y.astype(o_ref.dtype)


def mlp_forward(params, x, *, tm: int | None = None):
    """Fused equivalent of MLP.forward. params: list of (W:(K,N), b:(1,N))."""
    M, K = x.shape
    num_layers = len(params)
    n_out = params[-1][0].shape[1]

    # ---- row tile: full (padded) batch when small, 256 rows when large ----
    if tm is None:
        tm = _round_up(M, 8) if M <= 512 else 256
    m_pad = _round_up(M, tm)
    if m_pad != M:
        x = jnp.pad(x, ((0, m_pad - M), (0, 0)))

    # ---- pad final output dim to a lane-dense multiple of 128 ----
    n_pad = _round_up(n_out, 128)
    padded_params = list(params)
    if n_pad != n_out:
        w_last, b_last = params[-1]
        w_last = jnp.pad(w_last, ((0, 0), (0, n_pad - n_out)))
        b_last = jnp.pad(b_last, ((0, 0), (0, n_pad - n_out)))
        padded_params[-1] = (w_last, b_last)

    # ---- block specs: x row-tiled; every weight/bias full-array resident ----
    in_specs = [pl.BlockSpec((tm, K), lambda i: (i, 0))]
    flat_args = []
    for w, b in padded_params:
        k_in, k_out = w.shape
        in_specs.append(pl.BlockSpec((k_in, k_out), lambda i: (0, 0)))
        in_specs.append(pl.BlockSpec((1, k_out), lambda i: (0, 0)))
        flat_args.extend((w, b))

    grid = (m_pad // tm,)
    out = pl.pallas_call(
        functools.partial(_fused_mlp_kernel, num_layers=num_layers),
        out_shape=jax.ShapeDtypeStruct((m_pad, n_pad), x.dtype),
        grid=grid,
        in_specs=in_specs,
        out_specs=pl.BlockSpec((tm, n_pad), lambda i: (i, 0)),
        compiler_params=pltpu.CompilerParams(
            dimension_semantics=("parallel",)
        ),
    )(x, *flat_args)

    return out[:M, :n_out]


def init_mlp_params(key, input_dim, hidden_dim, output_dim, num_layers,
                    dtype=jnp.float32):
    """Deterministic init matching nn.Linear default (uniform +-1/sqrt(fan_in)).

    Weights stored as (in_features, out_features)."""
    h = [hidden_dim] * (num_layers - 1)
    dims_in = [input_dim] + h
    dims_out = h + [output_dim]
    params = []
    for n_in, n_out in zip(dims_in, dims_out):
        key, kw, kb = jax.random.split(key, 3)
        bound = 1.0 / (n_in ** 0.5)
        w = jax.random.uniform(kw, (n_in, n_out), dtype=dtype,
                               minval=-bound, maxval=bound)
        b = jax.random.uniform(kb, (1, n_out), dtype=dtype,
                               minval=-bound, maxval=bound)
        params.append((w, b))
    return params


def mlp_reference(params, x):
    num_layers = len(params)
    for i, (w, b) in enumerate(params):
        x = x @ w + b
        if i < num_layers - 1:
            x = jnp.maximum(x, 0.0)
    return x


if __name__ == "__main__":
    key = jax.random.PRNGKey(0)
    k_params, k_x = jax.random.split(key)

    batch = 16
    input_dim = 32
    hidden_dim = 64
    output_dim = 16
    num_layers = 3

    params = init_mlp_params(k_params, input_dim, hidden_dim, output_dim,
                             num_layers)
    x = jax.random.normal(k_x, (batch, input_dim), dtype=jnp.float32)

    out = mlp_forward(params, x)
    out = jax.block_until_ready(out)

    ref = mlp_reference(params, x)
    assert out.shape == (batch, output_dim)
    assert jnp.allclose(out, ref, atol=1e-5, rtol=1e-5)

    print("KERNEL_OK")
</pallas_src>

<mosaic_0001>
module attributes {stable_mosaic.version = 11 : i64} {
  func.func @_fused_mlp_kernel(%arg0: i32, %arg1: memref<16x32xf32, #tpu.memory_space<vmem>>, %arg2: memref<32x64xf32, #tpu.memory_space<vmem>>, %arg3: memref<1x64xf32, #tpu.memory_space<vmem>>, %arg4: memref<64x64xf32, #tpu.memory_space<vmem>>, %arg5: memref<1x64xf32, #tpu.memory_space<vmem>>, %arg6: memref<64x128xf32, #tpu.memory_space<vmem>>, %arg7: memref<1x128xf32, #tpu.memory_space<vmem>>, %arg8: memref<16x128xf32, #tpu.memory_space<vmem>>) attributes {dimension_semantics = [#tpu.dimension_semantics<parallel>], iteration_bounds = array<i64: 1>, scalar_prefetch = 0 : i64, scratch_operands = 0 : i64, tpu.core_type = #tpu.core_type<tc>, window_params = [{transform_indices = @transform_0, window_bounds = array<i64: 16, 32>}, {pipeline_mode = #tpu.pipeline_mode<synchronous>, transform_indices = @transform_1, window_bounds = array<i64: 32, 64>}, {pipeline_mode = #tpu.pipeline_mode<synchronous>, transform_indices = @transform_2, window_bounds = array<i64: 1, 64>}, {pipeline_mode = #tpu.pipeline_mode<synchronous>, transform_indices = @transform_3, window_bounds = array<i64: 64, 64>}, {pipeline_mode = #tpu.pipeline_mode<synchronous>, transform_indices = @transform_4, window_bounds = array<i64: 1, 64>}, {pipeline_mode = #tpu.pipeline_mode<synchronous>, transform_indices = @transform_5, window_bounds = array<i64: 64, 128>}, {pipeline_mode = #tpu.pipeline_mode<synchronous>, transform_indices = @transform_6, window_bounds = array<i64: 1, 128>}, {transform_indices = @transform_7, window_bounds = array<i64: 16, 128>}]} {
    %c0 = arith.constant 0 : index
    %c0_0 = arith.constant 0 : index
    %0 = vector.load %arg1[%c0, %c0_0] : memref<16x32xf32, #tpu.memory_space<vmem>>, vector<16x32xf32>
    %c0_1 = arith.constant 0 : index
    %c0_2 = arith.constant 0 : index
    %1 = vector.load %arg2[%c0_1, %c0_2] : memref<32x64xf32, #tpu.memory_space<vmem>>, vector<32x64xf32>
    %c0_3 = arith.constant 0 : index
    %c0_4 = arith.constant 0 : index
    %2 = vector.load %arg3[%c0_3, %c0_4] : memref<1x64xf32, #tpu.memory_space<vmem>>, vector<1x64xf32>
    %cst = arith.constant dense<0.000000e+00> : vector<16x64xf32>
    %3 = tpu.matmul %0, %1, %cst {dimension_numbers = #tpu.dot_dimension_numbers<[1], [0], [0], [1], [0, 0, 1, 1], [], []>} : vector<16x32xf32>, vector<32x64xf32>, vector<16x64xf32> -> vector<16x64xf32>
    %4 = vector.broadcast %2 : vector<1x64xf32> to vector<16x64xf32>
    %5 = arith.addf %3, %4 : vector<16x64xf32>
    %cst_5 = arith.constant 0.000000e+00 : f32
    %6 = vector.broadcast %cst_5 : f32 to vector<16x64xf32>
    %7 = arith.maximumf %5, %6 : vector<16x64xf32>
    %c0_6 = arith.constant 0 : index
    %c0_7 = arith.constant 0 : index
    %8 = vector.load %arg4[%c0_6, %c0_7] : memref<64x64xf32, #tpu.memory_space<vmem>>, vector<64x64xf32>
    %c0_8 = arith.constant 0 : index
    %c0_9 = arith.constant 0 : index
    %9 = vector.load %arg5[%c0_8, %c0_9] : memref<1x64xf32, #tpu.memory_space<vmem>>, vector<1x64xf32>
    %cst_10 = arith.constant dense<0.000000e+00> : vector<16x64xf32>
    %10 = tpu.matmul %7, %8, %cst_10 {dimension_numbers = #tpu.dot_dimension_numbers<[1], [0], [0], [1], [0, 0, 1, 1], [], []>} : vector<16x64xf32>, vector<64x64xf32>, vector<16x64xf32> -> vector<16x64xf32>
    %11 = vector.broadcast %9 : vector<1x64xf32> to vector<16x64xf32>
    %12 = arith.addf %10, %11 : vector<16x64xf32>
    %cst_11 = arith.constant 0.000000e+00 : f32
    %13 = vector.broadcast %cst_11 : f32 to vector<16x64xf32>
    %14 = arith.maximumf %12, %13 : vector<16x64xf32>
    %c0_12 = arith.constant 0 : index
    %c0_13 = arith.constant 0 : index
    %15 = vector.load %arg6[%c0_12, %c0_13] : memref<64x128xf32, #tpu.memory_space<vmem>>, vector<64x128xf32>
    %c0_14 = arith.constant 0 : index
    %c0_15 = arith.constant 0 : index
    %16 = vector.load %arg7[%c0_14, %c0_15] : memref<1x128xf32, #tpu.memory_space<vmem>>, vector<1x128xf32>
    %cst_16 = arith.constant dense<0.000000e+00> : vector<16x128xf32>
    %17 = tpu.matmul %14, %15, %cst_16 {dimension_numbers = #tpu.dot_dimension_numbers<[1], [0], [0], [1], [0, 0, 1, 1], [], []>} : vector<16x64xf32>, vector<64x128xf32>, vector<16x128xf32> -> vector<16x128xf32>
    %18 = vector.broadcast %16 : vector<1x128xf32> to vector<16x128xf32>
    %19 = arith.addf %17, %18 : vector<16x128xf32>
    %c0_17 = arith.constant 0 : index
    %c0_18 = arith.constant 0 : index
    %20 = vector.load %arg8[%c0_17, %c0_18] : memref<16x128xf32, #tpu.memory_space<vmem>>, vector<16x128xf32>
    tpu.vector_store %arg8[%c0_17, %c0_18], %19 {strides = array<i32>} : memref<16x128xf32, #tpu.memory_space<vmem>>, vector<16x128xf32>,
    return
  }
  func.func @transform_0(%arg0: i32) -> (i32, i32) {
    %c0_i32 = arith.constant 0 : i32
    %c0_i32_0 = arith.constant 0 : i32
    return %arg0, %c0_i32 : i32, i32
  }
  func.func @transform_1(%arg0: i32) -> (i32, i32) {
    %c0_i32 = arith.constant 0 : i32
    %c0_i32_0 = arith.constant 0 : i32
    %c0_i32_1 = arith.constant 0 : i32
    return %c0_i32, %c0_i32_0 : i32, i32
  }
  func.func @transform_2(%arg0: i32) -> (i32, i32) {
    %c0_i32 = arith.constant 0 : i32
    %c0_i32_0 = arith.constant 0 : i32
    %c0_i32_1 = arith.constant 0 : i32
    return %c0_i32, %c0_i32_0 : i32, i32
  }
  func.func @transform_3(%arg0: i32) -> (i32, i32) {
    %c0_i32 = arith.constant 0 : i32
    %c0_i32_0 = arith.constant 0 : i32
    %c0_i32_1 = arith.constant 0 : i32
    return %c0_i32, %c0_i32_0 : i32, i32
  }
  func.func @transform_4(%arg0: i32) -> (i32, i32) {
    %c0_i32 = arith.constant 0 : i32
    %c0_i32_0 = arith.constant 0 : i32
    %c0_i32_1 = arith.constant 0 : i32
    return %c0_i32, %c0_i32_0 : i32, i32
  }
  func.func @transform_5(%arg0: i32) -> (i32, i32) {
    %c0_i32 = arith.constant 0 : i32
    %c0_i32_0 = arith.constant 0 : i32
    %c0_i32_1 = arith.constant 0 : i32
    return %c0_i32, %c0_i32_0 : i32, i32
  }
  func.func @transform_6(%arg0: i32) -> (i32, i32) {
    %c0_i32 = arith.constant 0 : i32
    %c0_i32_0 = arith.constant 0 : i32
    %c0_i32_1 = arith.constant 0 : i32
    return %c0_i32, %c0_i32_0 : i32, i32
  }
  func.func @transform_7(%arg0: i32) -> (i32, i32) {
    %c0_i32 = arith.constant 0 : i32
    %c0_i32_0 = arith.constant 0 : i32
    return %arg0, %c0_i32 : i32, i32
  }
}

</mosaic_0001>

<llo_original>
// kernel: tpu_custom_call.1
$region0: #{tpu_custom_call.1}
  #allocation0 [shape = 'u32[]', space=smem, size = 0x4, offset = 0x4, fixed_abs, tag = 'smem constant byte address 0x4 - core index']
  #allocation1 [shape = 'u32[72,128]{1,0:T(1,128)}', space=vmem, size = 0x9000, scoped, tag = 'internal scratch']
  %s0 = inlined_call_operand.hbm [shape: f32[16,32], index: 0, kind: input, shape index: {}]
  %s1 = inlined_call_operand.hbm [shape: f32[32,64], index: 1, kind: input, shape index: {}]
  %s2 = inlined_call_operand.vmem [shape: f32[1,64], index: 2, kind: input, shape index: {}]
  %s3 = inlined_call_operand.hbm [shape: f32[64,64], index: 3, kind: input, shape index: {}]
  %s4 = inlined_call_operand.vmem [shape: f32[1,64], index: 4, kind: input, shape index: {}]
  %s5 = inlined_call_operand.hbm [shape: f32[64,128], index: 5, kind: input, shape index: {}]
  %s6 = inlined_call_operand.vmem [shape: f32[1,128], index: 6, kind: input, shape index: {}]
  %s7 = inlined_call_operand.hbm [shape: f32[16,128], index: 7, kind: output, shape index: {}]
  %s8 = sld [smem:[#allocation0]]
  $region54: #{tpu_custom_call.1} parent=0
    _
  %s10 = ssub.s32 1, %s8
  %s11 = scalar_select 0, %s10, %s8
  $region1: #{tpu_custom_call.1} parent=0
    #allocation2 [shape = 'u8[8192]{0}', space=vmem, size = 0x2000, scoped, tag = 'input window, operand 0, single buffered']
    #allocation3 [shape = 's32[1]{0}', space=sflag, size = 0x4, scoped, tag = 'scoped memory for tpu_custom_call.1']
    #allocation4 [shape = 's32[1]{0}', space=sflag, size = 0x4, scoped, tag = 'scoped memory for tpu_custom_call.1']
    #allocation5 [shape = 'u8[16384]{0}', space=vmem, size = 0x4000, scoped, tag = 'input window, operand 1, single buffered']
    #allocation6 [shape = 's32[1]{0}', space=sflag, size = 0x4, scoped, tag = 'scoped memory for tpu_custom_call.1']
    #allocation7 [shape = 'u8[32768]{0}', space=vmem, size = 0x8000, scoped, tag = 'input window, operand 3, single buffered']
    #allocation8 [shape = 'u8[32768]{0}', space=vmem, size = 0x8000, scoped, tag = 'input window, operand 5, single buffered']
    #allocation9 [shape = 's32[1]{0}', space=sflag, size = 0x4, scoped, tag = 'scoped memory for tpu_custom_call.1']
    #allocation10 [shape = 'u8[8192]{0}', space=vmem, size = 0x2000, scoped, tag = 'output window, operand 0, single buffered']
    %12 = vsyncpa [#allocation3], 0
    %13 = vsyncpa [#allocation6], 0
    %14 = vsyncpa [#allocation9], 0
    %15 = vsyncpa [#allocation4], 0
    // Predicated region
    $region2: #{tpu_custom_call.1} parent=1 // pred_check
      _
    $region3: #{tpu_custom_call.1} parent=1 // pred_check_branch
      %17 = sbr.rel (0) target = $region5
    $region4: #{tpu_custom_call.1} parent=1 // pred_region
      %19 = vsyncadd [#allocation3], 0
      %s20 = sshll.u32 %s0, 4
      %s21 = int_to_ptr.hbm [resolvable:$true] %s20
      %s22 = sshll.u32 [#allocation2], 4
      %s23 = int_to_ptr.vmem [resolvable:$true] %s22
      %28 = dma.hbm_to_vmem [thread:$0]  %s21, 256, %s23, [#allocation3], 128, 128, 8
    $region5: #{tpu_custom_call.1} parent=1 // pred_fallthru
      _
    // Predicated region
    $region6: #{tpu_custom_call.1} parent=1 // pred_check
      _
    $region7: #{tpu_custom_call.1} parent=1 // pred_check_branch
      %30 = sbr.rel (0) target = $region9
    $region8: #{tpu_custom_call.1} parent=1 // pred_region
      %32 = vsyncadd [#allocation6], 0
      %s33 = sshll.u32 %s1, 4
      %s34 = int_to_ptr.hbm [resolvable:$true] %s33
      %s35 = sshll.u32 [#allocation5], 4
      %s36 = int_to_ptr.vmem [resolvable:$true] %s35
      %41 = dma.hbm_to_vmem [thread:$0]  %s34, 512, %s36, [#allocation6], 128, 128, 8
    $region9: #{tpu_custom_call.1} parent=1 // pred_fallthru
      _
    // Predicated region
    $region10: #{tpu_custom_call.1} parent=1 // pred_check
      _
    $region11: #{tpu_custom_call.1} parent=1 // pred_check_branch
      %43 = sbr.rel (0) target = $region13
    $region12: #{tpu_custom_call.1} parent=1 // pred_region
      _
    $region13: #{tpu_custom_call.1} parent=1 // pred_fallthru
      _
    // Predicated region
    $region14: #{tpu_custom_call.1} parent=1 // pred_check
      _
    $region15: #{tpu_custom_call.1} parent=1 // pred_check_branch
      %45 = sbr.rel (0) target = $region17
    $region16: #{tpu_custom_call.1} parent=1 // pred_region
      %47 = vsyncadd [#allocation6], 0
      %s48 = sshll.u32 %s3, 4
      %s49 = int_to_ptr.hbm [resolvable:$true] %s48
      %s50 = sshll.u32 [#allocation7], 4
      %s51 = int_to_ptr.vmem [resolvable:$true] %s50
      %56 = dma.hbm_to_vmem [thread:$0]  %s49, 1024, %s51, [#allocation6], 128, 128, 8
    $region17: #{tpu_custom_call.1} parent=1 // pred_fallthru
      _
    // Predicated region
    $region18: #{tpu_custom_call.1} parent=1 // pred_check
      _
    $region19: #{tpu_custom_call.1} parent=1 // pred_check_branch
      %58 = sbr.rel (0) target = $region21
    $region20: #{tpu_custom_call.1} parent=1 // pred_region
      _
    $region21: #{tpu_custom_call.1} parent=1 // pred_fallthru
      _
    // Predicated region
    $region22: #{tpu_custom_call.1} parent=1 // pred_check
      _
    $region23: #{tpu_custom_call.1} parent=1 // pred_check_branch
      %60 = sbr.rel (0) target = $region25
    $region24: #{tpu_custom_call.1} parent=1 // pred_region
      %62 = vsyncadd [#allocation9], 0
      %s63 = sshll.u32 %s5, 4
      %s64 = int_to_ptr.hbm [resolvable:$true] %s63
      %s65 = sshll.u32 [#allocation8], 4
      %s66 = int_to_ptr.vmem [resolvable:$true] %s65
      %71 = dma.hbm_to_vmem [thread:$0]  %s64, 1024, %s66, [#allocation9], 128, 128, 8
    $region25: #{tpu_custom_call.1} parent=1 // pred_fallthru
      _
    // Predicated region
    $region26: #{tpu_custom_call.1} parent=1 // pred_check
      _
    $region27: #{tpu_custom_call.1} parent=1 // pred_check_branch
      %73 = sbr.rel (0) target = $region29
    $region28: #{tpu_custom_call.1} parent=1 // pred_region
      _
    $region29: #{tpu_custom_call.1} parent=1 // pred_fallthru
      _
    // Predicated region
    $region30: #{tpu_custom_call.1} parent=1 // pred_check
      _
    $region31: #{tpu_custom_call.1} parent=1 // pred_check_branch
      %75 = sbr.rel (0) target = $region33
    $region32: #{tpu_custom_call.1} parent=1 // pred_region
      %77 = dma.done [#allocation3], 256
    $region33: #{tpu_custom_call.1} parent=1 // pred_fallthru
      _
    // Predicated region
    $region34: #{tpu_custom_call.1} parent=1 // pred_check
      _
    $region35: #{tpu_custom_call.1} parent=1 // pred_check_branch
      %79 = sbr.rel (0) target = $region37
    $region36: #{tpu_custom_call.1} parent=1 // pred_region
      %81 = dma.done [#allocation6], 512
    $region37: #{tpu_custom_call.1} parent=1 // pred_fallthru
      _
    // Predicated region
    $region38: #{tpu_custom_call.1} parent=1 // pred_check
      _
    $region39: #{tpu_custom_call.1} parent=1 // pred_check_branch
      %83 = sbr.rel (0) target = $region41
    $region40: #{tpu_custom_call.1} parent=1 // pred_region
      %85 = dma.done [#allocation6], 1024
    $region41: #{tpu_custom_call.1} parent=1 // pred_fallthru
      _
    // Predicated region
    $region42: #{tpu_custom_call.1} parent=1 // pred_check
      _
    $region43: #{tpu_custom_call.1} parent=1 // pred_check_branch
      %87 = sbr.rel (0) target = $region45
    $region44: #{tpu_custom_call.1} parent=1 // pred_region
      %89 = dma.done [#allocation9], 1024
    $region45: #{tpu_custom_call.1} parent=1 // pred_fallthru
      _
    %v90 = vld [vmem:[#allocation2] sm:$0xff]
    %v91 = vld [vmem:[#allocation2 + $0x8] sm:$0xff]
    %v92 = vld [vmem:[#allocation5] sm:$0xff]
    %v93 = vld [vmem:[#allocation5 + $0x8] sm:$0xff]
    %v94 = vld [vmem:[#allocation5 + $0x10] sm:$0xff]
    %v95 = vld [vmem:[#allocation5 + $0x18] sm:$0xff]
    %v96 = vld [vmem:[%s2] sm:$0x1]
    %v98 = vperm.slane %v96, 0
    %vm100 = vcmask 261120
    %v102 = vsel %vm100, %v90, 0
    %v105 = vsel %vm100, %v91, 0
    %107 = vmatpush.msra.mxu0 0.0
    %108 = vmatpush.msra.mxu0 0.0
    %109 = vmatpush.msra.mxu0 0.0
    %110 = vmatpush.msra.mxu0 0.0
    %111 = vmatpush.msra.mxu0 0.0
    %112 = vmatpush.msra.mxu0 0.0
    %113 = vmatpush.msra.mxu0 0.0
    %114 = vmatpush.msra.mxu0 0.0
    %115 = vmatpush.msra.mxu0 0.0
    %116 = vmatpush.msra.mxu0 0.0
    %117 = vmatpush.msra.mxu0 0.0
    %118 = vmatpush.msra.mxu0 0.0
    %119 = vmatpush.msra.mxu0 %v95
    %120 = vmatpush.msra.mxu0 %v94
    %121 = vmatpush.msra.mxu0 %v93
    %122 = vmatpush.msra.mxu0 %v92
    %123 = vmatmul.f32.gmra.mxu0 %v102
    %v124 = vpop.f32.mrf.mxu0
    %v125 = vadd.f32 %v98, %v124
    %126 = vmatmul.f32.gmra.mxu0 %v105
    %v127 = vpop.f32.mrf.mxu0
    %v128 = vadd.f32 %v98, %v127
    %129 = vdwg.mxu0
    %v130 = vmax.f32 %v125, 0.0
    %v131 = vmax.f32 %v128, 0.0
    %v132 = vld [vmem:[#allocation7] sm:$0xff]
    %v133 = vld [vmem:[#allocation7 + $0x8] sm:$0xff]
    %v134 = vld [vmem:[#allocation7 + $0x10] sm:$0xff]
    %v135 = vld [vmem:[#allocation7 + $0x18] sm:$0xff]
    %v136 = vld [vmem:[#allocation7 + $0x20] sm:$0xff]
    %v137 = vld [vmem:[#allocation7 + $0x28] sm:$0xff]
    %v138 = vld [vmem:[#allocation7 + $0x30] sm:$0xff]
    %v139 = vld [vmem:[#allocation7 + $0x38] sm:$0xff]
    %v140 = vld [vmem:[%s4] sm:$0x1]
    %v142 = vperm.slane %v140, 0
    %vm144 = vcmask 523264
    %v146 = vsel %vm144, %v130, 0
    %v149 = vsel %vm144, %v131, 0
    %151 = vmatpush.msra.mxu0 0.0
    %152 = vmatpush.msra.mxu0 0.0
    %153 = vmatpush.msra.mxu0 0.0
    %154 = vmatpush.msra.mxu0 0.0
    %155 = vmatpush.msra.mxu0 0.0
    %156 = vmatpush.msra.mxu0 0.0
    %157 = vmatpush.msra.mxu0 0.0
    %158 = vmatpush.msra.mxu0 0.0
    %159 = vmatpush.msra.mxu0 %v139
    %160 = vmatpush.msra.mxu0 %v138
    %161 = vmatpush.msra.mxu0 %v137
    %162 = vmatpush.msra.mxu0 %v136
    %163 = vmatpush.msra.mxu0 %v135
    %164 = vmatpush.msra.mxu0 %v134
    %165 = vmatpush.msra.mxu0 %v133
    %166 = vmatpush.msra.mxu0 %v132
    %167 = vmatmul.f32.gmra.mxu0 %v146
    %v168 = vpop.f32.mrf.mxu0
    %v169 = vadd.f32 %v142, %v168
    %170 = vmatmul.f32.gmra.mxu0 %v149
    %v171 = vpop.f32.mrf.mxu0
    %v172 = vadd.f32 %v142, %v171
    %173 = vdwg.mxu0
    %v174 = vmax.f32 %v169, 0.0
    %v175 = vmax.f32 %v172, 0.0
    %v176 = vld [vmem:[#allocation8] sm:$0xff]
    %v177 = vld [vmem:[#allocation8 + $0x8] sm:$0xff]
    %v178 = vld [vmem:[#allocation8 + $0x10] sm:$0xff]
    %v179 = vld [vmem:[#allocation8 + $0x18] sm:$0xff]
    %v180 = vld [vmem:[#allocation8 + $0x20] sm:$0xff]
    %v181 = vld [vmem:[#allocation8 + $0x28] sm:$0xff]
    %v182 = vld [vmem:[#allocation8 + $0x30] sm:$0xff]
    %v183 = vld [vmem:[#allocation8 + $0x38] sm:$0xff]
    %v184 = vld [vmem:[%s6] sm:$0x1]
    %v186 = vperm.slane %v184, 0
    %v189 = vsel %vm144, %v174, 0
    %v192 = vsel %vm144, %v175, 0
    %194 = vmatpush.msra.mxu0 0.0
    %195 = vmatpush.msra.mxu0 0.0
    %196 = vmatpush.msra.mxu0 0.0
    %197 = vmatpush.msra.mxu0 0.0
    %198 = vmatpush.msra.mxu0 0.0
    %199 = vmatpush.msra.mxu0 0.0
    %200 = vmatpush.msra.mxu0 0.0
    %201 = vmatpush.msra.mxu0 0.0
    %202 = vmatpush.msra.mxu0 %v183
    %203 = vmatpush.msra.mxu0 %v182
    %204 = vmatpush.msra.mxu0 %v181
    %205 = vmatpush.msra.mxu0 %v180
    %206 = vmatpush.msra.mxu0 %v179
    %207 = vmatpush.msra.mxu0 %v178
    %208 = vmatpush.msra.mxu0 %v177
    %209 = vmatpush.msra.mxu0 %v176
    %210 = vmatmul.f32.gmra.mxu0 %v189
    %v211 = vpop.f32.mrf.mxu0
    %v212 = vadd.f32 %v186, %v211
    %213 = vmatmul.f32.gmra.mxu0 %v192
    %v214 = vpop.f32.mrf.mxu0
    %v215 = vadd.f32 %v186, %v214
    %216 = vdwg.mxu0
    %217 = vst [vmem:[#allocation10] sm:$0xff] %v212
    %218 = vst [vmem:[#allocation10 + $0x8] sm:$0xff] %v215
    // Predicated region
    $region46: #{tpu_custom_call.1} parent=1 // pred_check
      _
    $region47: #{tpu_custom_call.1} parent=1 // pred_check_branch
      %220 = sbr.rel (0) target = $region49
    $region48: #{tpu_custom_call.1} parent=1 // pred_region
      %222 = vsyncadd [#allocation4], 0
      %s223 = sshll.u32 [#allocation10], 4
      %s224 = int_to_ptr.vmem [resolvable:$true] %s223
      %s225 = sshll.u32 %s7, 4
      %s226 = int_to_ptr.hbm [resolvable:$true] %s225
      %231 = dma.vmem_to_hbm [thread:$0]  %s224, 256, %s226, [#allocation4], 128, 128, 8
    $region49: #{tpu_custom_call.1} parent=1 // pred_fallthru
      _
    // Predicated region
    $region50: #{tpu_custom_call.1} parent=1 // pred_check
      _
    $region51: #{tpu_custom_call.1} parent=1 // pred_check_branch
      %233 = sbr.rel (0) target = $region53
    $region52: #{tpu_custom_call.1} parent=1 // pred_region
      %235 = dma.done [#allocation4], 256
    $region53: #{tpu_custom_call.1} parent=1 // pred_fallthru
      _
    %236 = vsyncpa [#allocation3], 1
    %237 = vsyncpa [#allocation6], 1
    %238 = vsyncpa [#allocation9], 1
    %239 = vsyncpa [#allocation4], 1

</llo_original>
